<compile_context>
chip_gen: v7x
topology: tpu7x:2x2x1
jax: 0.10.0
libtpu: 0.0.40
codegen_flags: <defaults>
</compile_context>

<pallas_src>
import jax
import jax.numpy as jnp
from jax.experimental import pallas as pl
from jax.experimental.pallas import tpu as pltpu


def _round_up(a, b):
    return ((a + b - 1) // b) * b


def _vmem_limit_bytes():
    """Scoped-VMEM limit per generation (leaves headroom below physical cap)."""
    try:
        cap = getattr(pltpu.get_tpu_info(), "vmem_capacity_bytes", None)
    except Exception:
        cap = None
    if not cap:
        cap = 64 * 1024 * 1024      # v7x per-TensorCore size: safe everywhere
    # ~75% of physical, always leaving >= 8 MiB for Mosaic internals.
    return max(32 * 1024 * 1024, min((cap * 3) // 4, cap - 8 * 1024 * 1024))


def graphconv_kernel(x_ref, nbr_ref, w_ref, aggred_ref, nbr_out_ref):
    # x_ref       : [TB, Fin]      node features for this batch tile
    # nbr_ref     : [K, TB, Fin]   slot-major neighbors (K = leading axis)
    # w_ref       : [Fin, Fout]    W.T, VMEM-resident (constant index_map)
    # aggred_ref  : [TB, Fout]
    # nbr_out_ref : [K, TB, Fout]  slot-major neighbor outputs
    k = nbr_ref.shape[0]
    w = w_ref[...]

    # x @ W.T on the MXU; accumulate in f32 regardless of input dtype.
    xw = jnp.dot(x_ref[...], w, preferred_element_type=jnp.float32)  # [TB, Fout]

    acc = None
    # K is a small static Python int -> fully unrolled.  Every slice below is
    # a whole [TB, F] slab (leading-axis index), so the sums/broadcast-adds are
    # plain VPU ops on full vregs and every store is tile-aligned.
    for s in range(k):
        nw_s = jnp.dot(nbr_ref[s], w, preferred_element_type=jnp.float32)
        acc = nw_s if acc is None else acc + nw_s
        nbr_out_ref[s] = (xw + nw_s).astype(nbr_out_ref.dtype)
    aggred_ref[...] = acc.astype(aggred_ref.dtype)


def graph_conv(x, neighbor, weight_t, *, block_b=None):
    """x: [B, Fin], neighbor: [B, K, Fin], weight_t: [Fin, Fout] (= W.T)."""
    B, Fin = x.shape
    _, K, _ = neighbor.shape
    Fout = weight_t.shape[1]
    itemsize = jnp.dtype(x.dtype).itemsize
    vmem_limit = _vmem_limit_bytes()

    # ---- choose the batch tile -------------------------------------------
    if block_b is None:
        w_bytes = 2 * Fin * Fout * itemsize          # resident W + default 2nd buffer
        headroom = 4 * 1024 * 1024                   # Mosaic internal scratch etc.
        budget = max(vmem_limit - w_bytes - headroom, 1 * 1024 * 1024)
        per_row = (
            2 * (K + 1) * Fin * itemsize             # double-buffered inputs
            + 2 * (K + 1) * Fout * itemsize          # double-buffered outputs
            + (K + 1) * Fout * 4                     # f32 matmul results
        )
        tb = budget // max(per_row, 1)
        tb = min(tb, 2048)
        # Keep >= 4 grid steps on large batches so "parallel" sharding across
        # TensorCores (v7x) has work, without shrinking below ~512 rows.
        tb = min(tb, max(512, _round_up(-(-B // 4), 8)))
        block_b = tb
    block_b = int(block_b)
    if block_b >= 128:
        block_b = (block_b // 128) * 128
    block_b = max(8, (block_b // 8) * 8)             # sublane granularity
    block_b = min(block_b, _round_up(B, 8))          # don't over-pad tiny batches

    # ---- pad the batch and lay the neighbors out slot-major ---------------
    B_pad = _round_up(B, block_b)
    x_p = x
    nbr = neighbor
    if B_pad > B:
        x_p = jnp.pad(x_p, ((0, B_pad - B), (0, 0)))
        nbr = jnp.pad(nbr, ((0, B_pad - B), (0, 0), (0, 0)))
    # One-time transpose outside the per-step path: [B, K, Fin] -> [K, B, Fin].
    nbr_slot_major = jnp.transpose(nbr, (1, 0, 2))

    grid = (B_pad // block_b,)

    out_shape = (
        jax.ShapeDtypeStruct((B_pad, Fout), x.dtype),
        jax.ShapeDtypeStruct((K, B_pad, Fout), x.dtype),    # slot-major
    )

    aggred, nbr_out_km = pl.pallas_call(
        graphconv_kernel,
        out_shape=out_shape,
        grid=grid,
        in_specs=[
            pl.BlockSpec((block_b, Fin), lambda i: (i, 0)),          # x tile
            pl.BlockSpec((K, block_b, Fin), lambda i: (0, i, 0)),    # neighbors
            pl.BlockSpec((Fin, Fout), lambda i: (0, 0)),             # resident W.T
        ],
        out_specs=(
            pl.BlockSpec((block_b, Fout), lambda i: (i, 0)),
            pl.BlockSpec((K, block_b, Fout), lambda i: (0, i, 0)),
        ),
        compiler_params=pltpu.CompilerParams(
            dimension_semantics=("parallel",),       # shards over v7x's 2 TCs
            vmem_limit_bytes=vmem_limit,
        ),
    )(x_p, nbr_slot_major, weight_t)

    # Back to the module's per-node [B, K, Fout] layout once, outside the
    # hot path.
    neighbor_out = jnp.transpose(nbr_out_km, (1, 0, 2))[:B]
    return aggred[:B], neighbor_out


def _reference(x, neighbor, weight_t):
    xw = x @ weight_t
    nw = jnp.einsum("bkf,fo->bko", neighbor, weight_t)
    return nw.sum(axis=1), xw[:, None, :] + nw


if __name__ == "__main__":
    key = jax.random.PRNGKey(0)
    kx, kn, kw = jax.random.split(key, 3)

    # ---- small primary case (matches the module's forward) ----------------
    B, K, Fin, Fout = 2, 4, 32, 32
    x = jax.random.normal(kx, (B, Fin), dtype=jnp.float32)
    neighbor = jax.random.normal(kn, (B, K, Fin), dtype=jnp.float32)

    # nn.Linear(in, out, bias=False): weight [out, in]; kernel uses W.T.
    bound = 1.0 / (Fin ** 0.5)
    weight = jax.random.uniform(
        kw, (Fout, Fin), minval=-bound, maxval=bound, dtype=jnp.float32
    )
    weight_t = weight.T  # [Fin, Fout]

    aggred_x, nbr_out = graph_conv(x, neighbor, weight_t)
    jax.block_until_ready((aggred_x, nbr_out))

    ref_x, ref_nbr = _reference(x, neighbor, weight_t)
    assert aggred_x.shape == ref_x.shape and nbr_out.shape == ref_nbr.shape
    assert jnp.allclose(aggred_x, ref_x, atol=1e-5, rtol=1e-5)
    assert jnp.allclose(nbr_out, ref_nbr, atol=1e-5, rtol=1e-5)

    # ---- secondary case: exercises multiple grid tiles + batch padding ----
    B2 = 20
    x2 = jax.random.normal(kx, (B2, Fin), dtype=jnp.float32)
    n2 = jax.random.normal(kn, (B2, K, Fin), dtype=jnp.float32)
    a2, o2 = graph_conv(x2, n2, weight_t, block_b=8)   # grid of 3 tiles
    jax.block_until_ready((a2, o2))
    r2a, r2o = _reference(x2, n2, weight_t)
    assert jnp.allclose(a2, r2a, atol=1e-5, rtol=1e-5)
    assert jnp.allclose(o2, r2o, atol=1e-5, rtol=1e-5)

    print("KERNEL_OK")
</pallas_src>

<mosaic_0001>
module attributes {stable_mosaic.version = 11 : i64} {
  func.func @graphconv_kernel(%arg0: i32, %arg1: memref<8x32xf32, #tpu.memory_space<vmem>>, %arg2: memref<4x8x32xf32, #tpu.memory_space<vmem>>, %arg3: memref<32x32xf32, #tpu.memory_space<vmem>>, %arg4: memref<8x32xf32, #tpu.memory_space<vmem>>, %arg5: memref<4x8x32xf32, #tpu.memory_space<vmem>>) attributes {dimension_semantics = [#tpu.dimension_semantics<parallel>], iteration_bounds = array<i64: 1>, scalar_prefetch = 0 : i64, scratch_operands = 0 : i64, tpu.core_type = #tpu.core_type<tc>, window_params = [{transform_indices = @transform_0, window_bounds = array<i64: 8, 32>}, {transform_indices = @transform_1, window_bounds = array<i64: 4, 8, 32>}, {pipeline_mode = #tpu.pipeline_mode<synchronous>, transform_indices = @transform_2, window_bounds = array<i64: 32, 32>}, {transform_indices = @transform_3, window_bounds = array<i64: 8, 32>}, {transform_indices = @transform_4, window_bounds = array<i64: 4, 8, 32>}]} {
    %c0 = arith.constant 0 : index
    %c0_0 = arith.constant 0 : index
    %0 = vector.load %arg3[%c0, %c0_0] : memref<32x32xf32, #tpu.memory_space<vmem>>, vector<32x32xf32>
    %c0_1 = arith.constant 0 : index
    %c0_2 = arith.constant 0 : index
    %1 = vector.load %arg1[%c0_1, %c0_2] : memref<8x32xf32, #tpu.memory_space<vmem>>, vector<8x32xf32>
    %cst = arith.constant dense<0.000000e+00> : vector<8x32xf32>
    %2 = tpu.matmul %1, %0, %cst {dimension_numbers = #tpu.dot_dimension_numbers<[1], [0], [0], [1], [0, 0, 1, 1], [], []>} : vector<8x32xf32>, vector<32x32xf32>, vector<8x32xf32> -> vector<8x32xf32>
    %c0_3 = arith.constant 0 : index
    %c0_4 = arith.constant 0 : index
    %c0_5 = arith.constant 0 : index
    %3 = vector.load %arg2[%c0_3, %c0_4, %c0_5] : memref<4x8x32xf32, #tpu.memory_space<vmem>>, vector<1x8x32xf32>
    %4 = vector.shape_cast %3 : vector<1x8x32xf32> to vector<8x32xf32>
    %cst_6 = arith.constant dense<0.000000e+00> : vector<8x32xf32>
    %5 = tpu.matmul %4, %0, %cst_6 {dimension_numbers = #tpu.dot_dimension_numbers<[1], [0], [0], [1], [0, 0, 1, 1], [], []>} : vector<8x32xf32>, vector<32x32xf32>, vector<8x32xf32> -> vector<8x32xf32>
    %6 = arith.addf %2, %5 : vector<8x32xf32>
    %c0_7 = arith.constant 0 : index
    %c0_8 = arith.constant 0 : index
    %c0_9 = arith.constant 0 : index
    %7 = vector.load %arg5[%c0_7, %c0_8, %c0_9] : memref<4x8x32xf32, #tpu.memory_space<vmem>>, vector<1x8x32xf32>
    %8 = vector.shape_cast %7 : vector<1x8x32xf32> to vector<8x32xf32>
    %9 = vector.shape_cast %6 : vector<8x32xf32> to vector<1x8x32xf32>
    tpu.vector_store %arg5[%c0_7, %c0_8, %c0_9], %9 {strides = array<i32>} : memref<4x8x32xf32, #tpu.memory_space<vmem>>, vector<1x8x32xf32>,
    %c1 = arith.constant 1 : index
    %c0_10 = arith.constant 0 : index
    %c0_11 = arith.constant 0 : index
    %10 = vector.load %arg2[%c1, %c0_10, %c0_11] : memref<4x8x32xf32, #tpu.memory_space<vmem>>, vector<1x8x32xf32>
    %11 = vector.shape_cast %10 : vector<1x8x32xf32> to vector<8x32xf32>
    %cst_12 = arith.constant dense<0.000000e+00> : vector<8x32xf32>
    %12 = tpu.matmul %11, %0, %cst_12 {dimension_numbers = #tpu.dot_dimension_numbers<[1], [0], [0], [1], [0, 0, 1, 1], [], []>} : vector<8x32xf32>, vector<32x32xf32>, vector<8x32xf32> -> vector<8x32xf32>
    %13 = arith.addf %5, %12 : vector<8x32xf32>
    %14 = arith.addf %2, %12 : vector<8x32xf32>
    %c1_13 = arith.constant 1 : index
    %c0_14 = arith.constant 0 : index
    %c0_15 = arith.constant 0 : index
    %15 = vector.load %arg5[%c1_13, %c0_14, %c0_15] : memref<4x8x32xf32, #tpu.memory_space<vmem>>, vector<1x8x32xf32>
    %16 = vector.shape_cast %15 : vector<1x8x32xf32> to vector<8x32xf32>
    %17 = vector.shape_cast %14 : vector<8x32xf32> to vector<1x8x32xf32>
    tpu.vector_store %arg5[%c1_13, %c0_14, %c0_15], %17 {strides = array<i32>} : memref<4x8x32xf32, #tpu.memory_space<vmem>>, vector<1x8x32xf32>,
    %c2 = arith.constant 2 : index
    %c0_16 = arith.constant 0 : index
    %c0_17 = arith.constant 0 : index
    %18 = vector.load %arg2[%c2, %c0_16, %c0_17] : memref<4x8x32xf32, #tpu.memory_space<vmem>>, vector<1x8x32xf32>
    %19 = vector.shape_cast %18 : vector<1x8x32xf32> to vector<8x32xf32>
    %cst_18 = arith.constant dense<0.000000e+00> : vector<8x32xf32>
    %20 = tpu.matmul %19, %0, %cst_18 {dimension_numbers = #tpu.dot_dimension_numbers<[1], [0], [0], [1], [0, 0, 1, 1], [], []>} : vector<8x32xf32>, vector<32x32xf32>, vector<8x32xf32> -> vector<8x32xf32>
    %21 = arith.addf %13, %20 : vector<8x32xf32>
    %22 = arith.addf %2, %20 : vector<8x32xf32>
    %c2_19 = arith.constant 2 : index
    %c0_20 = arith.constant 0 : index
    %c0_21 = arith.constant 0 : index
    %23 = vector.load %arg5[%c2_19, %c0_20, %c0_21] : memref<4x8x32xf32, #tpu.memory_space<vmem>>, vector<1x8x32xf32>
    %24 = vector.shape_cast %23 : vector<1x8x32xf32> to vector<8x32xf32>
    %25 = vector.shape_cast %22 : vector<8x32xf32> to vector<1x8x32xf32>
    tpu.vector_store %arg5[%c2_19, %c0_20, %c0_21], %25 {strides = array<i32>} : memref<4x8x32xf32, #tpu.memory_space<vmem>>, vector<1x8x32xf32>,
    %c3 = arith.constant 3 : index
    %c0_22 = arith.constant 0 : index
    %c0_23 = arith.constant 0 : index
    %26 = vector.load %arg2[%c3, %c0_22, %c0_23] : memref<4x8x32xf32, #tpu.memory_space<vmem>>, vector<1x8x32xf32>
    %27 = vector.shape_cast %26 : vector<1x8x32xf32> to vector<8x32xf32>
    %cst_24 = arith.constant dense<0.000000e+00> : vector<8x32xf32>
    %28 = tpu.matmul %27, %0, %cst_24 {dimension_numbers = #tpu.dot_dimension_numbers<[1], [0], [0], [1], [0, 0, 1, 1], [], []>} : vector<8x32xf32>, vector<32x32xf32>, vector<8x32xf32> -> vector<8x32xf32>
    %29 = arith.addf %21, %28 : vector<8x32xf32>
    %30 = arith.addf %2, %28 : vector<8x32xf32>
    %c3_25 = arith.constant 3 : index
    %c0_26 = arith.constant 0 : index
    %c0_27 = arith.constant 0 : index
    %31 = vector.load %arg5[%c3_25, %c0_26, %c0_27] : memref<4x8x32xf32, #tpu.memory_space<vmem>>, vector<1x8x32xf32>
    %32 = vector.shape_cast %31 : vector<1x8x32xf32> to vector<8x32xf32>
    %33 = vector.shape_cast %30 : vector<8x32xf32> to vector<1x8x32xf32>
    tpu.vector_store %arg5[%c3_25, %c0_26, %c0_27], %33 {strides = array<i32>} : memref<4x8x32xf32, #tpu.memory_space<vmem>>, vector<1x8x32xf32>,
    %c0_28 = arith.constant 0 : index
    %c0_29 = arith.constant 0 : index
    %34 = vector.load %arg4[%c0_28, %c0_29] : memref<8x32xf32, #tpu.memory_space<vmem>>, vector<8x32xf32>
    tpu.vector_store %arg4[%c0_28, %c0_29], %29 {strides = array<i32>} : memref<8x32xf32, #tpu.memory_space<vmem>>, vector<8x32xf32>,
    return
  }
  func.func @transform_0(%arg0: i32) -> (i32, i32) {
    %c0_i32 = arith.constant 0 : i32
    %c0_i32_0 = arith.constant 0 : i32
    return %arg0, %c0_i32 : i32, i32
  }
  func.func @transform_1(%arg0: i32) -> (i32, i32, i32) {
    %c0_i32 = arith.constant 0 : i32
    %c0_i32_0 = arith.constant 0 : i32
    %c0_i32_1 = arith.constant 0 : i32
    return %c0_i32, %arg0, %c0_i32_0 : i32, i32, i32
  }
  func.func @transform_2(%arg0: i32) -> (i32, i32) {
    %c0_i32 = arith.constant 0 : i32
    %c0_i32_0 = arith.constant 0 : i32
    %c0_i32_1 = arith.constant 0 : i32
    return %c0_i32, %c0_i32_0 : i32, i32
  }
  func.func @transform_3(%arg0: i32) -> (i32, i32) {
    %c0_i32 = arith.constant 0 : i32
    %c0_i32_0 = arith.constant 0 : i32
    return %arg0, %c0_i32 : i32, i32
  }
  func.func @transform_4(%arg0: i32) -> (i32, i32, i32) {
    %c0_i32 = arith.constant 0 : i32
    %c0_i32_0 = arith.constant 0 : i32
    %c0_i32_1 = arith.constant 0 : i32
    return %c0_i32, %arg0, %c0_i32_0 : i32, i32, i32
  }
}

</mosaic_0001>

<llo_original>
// kernel: tpu_custom_call.1
$region0: #{tpu_custom_call.1}
  #allocation0 [shape = 'u32[]', space=smem, size = 0x4, offset = 0x4, fixed_abs, tag = 'smem constant byte address 0x4 - core index']
  #allocation1 [shape = 'u32[144,128]{1,0:T(1,128)}', space=vmem, size = 0x12000, scoped, tag = 'internal scratch']
  %s0 = inlined_call_operand.hbm [shape: f32[8,32], index: 0, kind: input, shape index: {}]
  %s1 = inlined_call_operand.hbm [shape: f32[4,8,32], index: 1, kind: input, shape index: {}]
  %s2 = inlined_call_operand.hbm [shape: f32[32,32], index: 2, kind: input, shape index: {}]
  %s3 = inlined_call_operand.hbm [shape: f32[8,32], index: 3, kind: output, shape index: {0}]
  %s4 = inlined_call_operand.hbm [shape: f32[4,8,32], index: 4, kind: output, shape index: {1}]
  %5 = xla_tuple %s3, %s4
  %s6 = sld [smem:[#allocation0]]
  $region42: #{tpu_custom_call.1} parent=0
    _
  %s8 = ssub.s32 1, %s6
  %s9 = scalar_select 0, %s8, %s6
  $region1: #{tpu_custom_call.1} parent=0
    #allocation2 [shape = 'u8[4096]{0}', space=vmem, size = 0x1000, scoped, tag = 'input window, operand 0, single buffered']
    #allocation3 [shape = 's32[1]{0}', space=sflag, size = 0x4, scoped, tag = 'scoped memory for tpu_custom_call.1']
    #allocation4 [shape = 's32[1]{0}', space=sflag, size = 0x4, scoped, tag = 'scoped memory for tpu_custom_call.1']
    #allocation5 [shape = 'u8[16384]{0}', space=vmem, size = 0x4000, scoped, tag = 'input window, operand 1, single buffered']
    #allocation6 [shape = 's32[1]{0}', space=sflag, size = 0x4, scoped, tag = 'scoped memory for tpu_custom_call.1']
    #allocation7 [shape = 'u8[16384]{0}', space=vmem, size = 0x4000, scoped, tag = 'input window, operand 2, single buffered']
    #allocation8 [shape = 'u8[4096]{0}', space=vmem, size = 0x1000, scoped, tag = 'output window, operand 0, single buffered']
    #allocation9 [shape = 'u8[16384]{0}', space=vmem, size = 0x4000, scoped, tag = 'output window, operand 1, single buffered']
    #allocation10 [shape = 's32[1]{0}', space=sflag, size = 0x4, scoped, tag = 'scoped memory for tpu_custom_call.1']
    %10 = vsyncpa [#allocation3], 0
    %11 = vsyncpa [#allocation6], 0
    %12 = vsyncpa [#allocation4], 0
    %13 = vsyncpa [#allocation10], 0
    // Predicated region
    $region2: #{tpu_custom_call.1} parent=1 // pred_check
      _
    $region3: #{tpu_custom_call.1} parent=1 // pred_check_branch
      %15 = sbr.rel (0) target = $region5
    $region4: #{tpu_custom_call.1} parent=1 // pred_region
      %s17 = ssub.s32 128, 128
      %18 = vsyncadd [#allocation3], %s17
      %s20 = sshll.u32 [#allocation2], 4
      %s21 = int_to_ptr.vmem [resolvable:$true] %s20
      %23 = dma.hbm_to_vmem [thread:$0]  %s0, 128, %s21, [#allocation3]
    $region5: #{tpu_custom_call.1} parent=1 // pred_fallthru
      _
    // Predicated region
    $region6: #{tpu_custom_call.1} parent=1 // pred_check
      _
    $region7: #{tpu_custom_call.1} parent=1 // pred_check_branch
      %25 = sbr.rel (0) target = $region9
    $region8: #{tpu_custom_call.1} parent=1 // pred_region
      %s27 = ssub.s32 512, 512
      %28 = vsyncadd [#allocation6], %s27
      %s29 = sshll.u32 [#allocation5], 4
      %s30 = int_to_ptr.vmem [resolvable:$true] %s29
      %35 = dma.hbm_to_vmem [thread:$0]  %s1, 512, %s30, [#allocation6], 128, 128, 8
    $region9: #{tpu_custom_call.1} parent=1 // pred_fallthru
      _
    // Predicated region
    $region10: #{tpu_custom_call.1} parent=1 // pred_check
      _
    $region11: #{tpu_custom_call.1} parent=1 // pred_check_branch
      %37 = sbr.rel (0) target = $region13
    $region12: #{tpu_custom_call.1} parent=1 // pred_region
      %s39 = ssub.s32 512, 512
      %40 = vsyncadd [#allocation6], %s39
      %s41 = sshll.u32 [#allocation7], 4
      %s42 = int_to_ptr.vmem [resolvable:$true] %s41
      %47 = dma.hbm_to_vmem [thread:$0]  %s2, 512, %s42, [#allocation6], 128, 128, 8
    $region13: #{tpu_custom_call.1} parent=1 // pred_fallthru
      _
    // Predicated region
    $region14: #{tpu_custom_call.1} parent=1 // pred_check
      _
    $region15: #{tpu_custom_call.1} parent=1 // pred_check_branch
      %49 = sbr.rel (0) target = $region17
    $region16: #{tpu_custom_call.1} parent=1 // pred_region
      %50 = dma.done [#allocation3], 128
    $region17: #{tpu_custom_call.1} parent=1 // pred_fallthru
      _
    // Predicated region
    $region18: #{tpu_custom_call.1} parent=1 // pred_check
      _
    $region19: #{tpu_custom_call.1} parent=1 // pred_check_branch
      %52 = sbr.rel (0) target = $region21
    $region20: #{tpu_custom_call.1} parent=1 // pred_region
      %53 = dma.done [#allocation6], 512
    $region21: #{tpu_custom_call.1} parent=1 // pred_fallthru
      _
    // Predicated region
    $region22: #{tpu_custom_call.1} parent=1 // pred_check
      _
    $region23: #{tpu_custom_call.1} parent=1 // pred_check_branch
      %55 = sbr.rel (0) target = $region25
    $region24: #{tpu_custom_call.1} parent=1 // pred_region
      %56 = dma.done [#allocation6], 512
    $region25: #{tpu_custom_call.1} parent=1 // pred_fallthru
      _
    %v57 = vld [vmem:[#allocation7] sm:$0xff]
    %v58 = vld [vmem:[#allocation7 + $0x8] sm:$0xff]
    %v59 = vld [vmem:[#allocation7 + $0x10] sm:$0xff]
    %v60 = vld [vmem:[#allocation7 + $0x18] sm:$0xff]
    %v61 = vld [vmem:[#allocation2] sm:$0xff]
    %vm62 = vcmask 261120
    %v64 = vsel %vm62, %v61, 0
    %66 = vmatprep.subr.mxu0 0.0
    %67 = vmatpush1.msra.mxu0 %v57
    %68 = vmatprep.subr.mxu0 0.0
    %69 = vmatpush1.msra.mxu0 %v58
    %70 = vmatprep.subr.mxu0 0.0
    %71 = vmatpush1.msra.mxu0 %v59
    %72 = vmatprep.subr.mxu0 0.0
    %73 = vmatpush1.msra.mxu0 %v60
    %74 = vmatprep.subr.mxu0 0.0
    %75 = vmatpush1.msra.mxu0 0.0
    %76 = vmatprep.subr.mxu0 0.0
    %77 = vmatpush1.msra.mxu0 0.0
    %78 = vmatprep.subr.mxu0 0.0
    %79 = vmatpush1.msra.mxu0 0.0
    %80 = vmatprep.subr.mxu0 0.0
    %81 = vmatpush1.msra.mxu0 0.0
    %82 = vmatprep.subr.mxu0 0.0
    %83 = vmatpush1.msra.mxu0 0.0
    %84 = vmatprep.subr.mxu0 0.0
    %85 = vmatpush1.msra.mxu0 0.0
    %86 = vmatprep.subr.mxu0 0.0
    %87 = vmatpush1.msra.mxu0 0.0
    %88 = vmatprep.subr.mxu0 0.0
    %89 = vmatpush1.msra.mxu0 0.0
    %90 = vmatprep.subr.mxu0 0.0
    %91 = vmatpush1.msra.mxu0 0.0
    %92 = vmatprep.subr.mxu0 0.0
    %93 = vmatpush1.msra.mxu0 0.0
    %94 = vmatprep.subr.mxu0 0.0
    %95 = vmatpush1.msra.mxu0 0.0
    %96 = vmatprep.subr.mxu0 0.0
    %97 = vmatpush1.msra.mxu0 0.0
    %98 = vmatprep.subr.mxu0 0.0
    %99 = vmatpush1.msra.mxu0 0.0
    %100 = vmatprep.subr.mxu0 0.0
    %101 = vmatpush1.msra.mxu0 0.0
    %102 = vmatprep.subr.mxu0 0.0
    %103 = vmatpush1.msra.mxu0 0.0
    %104 = vmatprep.subr.mxu0 0.0
    %105 = vmatpush1.msra.mxu0 0.0
    %106 = vmatprep.subr.mxu0 0.0
    %107 = vmatpush1.msra.mxu0 0.0
    %108 = vmatprep.subr.mxu0 0.0
    %109 = vmatpush1.msra.mxu0 0.0
    %110 = vmatprep.subr.mxu0 0.0
    %111 = vmatpush1.msra.mxu0 0.0
    %112 = vmatprep.subr.mxu0 0.0
    %113 = vmatpush1.msra.mxu0 0.0
    %114 = vmatprep.subr.mxu0 0.0
    %115 = vmatpush1.msra.mxu0 0.0
    %116 = vmatprep.subr.mxu0 0.0
    %117 = vmatpush1.msra.mxu0 0.0
    %118 = vmatprep.subr.mxu0 0.0
    %119 = vmatpush1.msra.mxu0 0.0
    %120 = vmatprep.subr.mxu0 0.0
    %121 = vmatpush1.msra.mxu0 0.0
    %122 = vmatprep.subr.mxu0 0.0
    %123 = vmatpush1.msra.mxu0 0.0
    %124 = vmatprep.subr.mxu0 0.0
    %125 = vmatpush1.msra.mxu0 0.0
    %126 = vmatprep.subr.mxu0 0.0
    %127 = vmatpush1.msra.mxu0 0.0
    %128 = vmatprep.subr.mxu0 0.0
    %129 = vmatpush1.msra.mxu0 0.0
    %130 = vmatprep.mubr.f32.mxu0 0.0
    %131 = vmatmul.mubr.f32.gmra.mrb[0].mxu0 %v64
    %v132 = vpop.f32.mrb[0].mxu0
    %v133 = vadd.f32 0.0, %v132
    %v134 = vpop.f32.mrb[0].mxu0
    %135 = vdwg.mxu0
    %v136 = vld [vmem:[#allocation5] sm:$0xff]
    %v138 = vsel %vm62, %v136, 0
    %140 = vmatprep.subr.mxu0 0.0
    %141 = vmatpush1.msra.mxu0 %v57
    %142 = vmatprep.subr.mxu0 0.0
    %143 = vmatpush1.msra.mxu0 %v58
    %144 = vmatprep.subr.mxu0 0.0
    %145 = vmatpush1.msra.mxu0 %v59
    %146 = vmatprep.subr.mxu0 0.0
    %147 = vmatpush1.msra.mxu0 %v60
    %148 = vmatprep.subr.mxu0 0.0
    %149 = vmatpush1.msra.mxu0 0.0
    %150 = vmatprep.subr.mxu0 0.0
    %151 = vmatpush1.msra.mxu0 0.0
    %152 = vmatprep.subr.mxu0 0.0
    %153 = vmatpush1.msra.mxu0 0.0
    %154 = vmatprep.subr.mxu0 0.0
    %155 = vmatpush1.msra.mxu0 0.0
    %156 = vmatprep.subr.mxu0 0.0
    %157 = vmatpush1.msra.mxu0 0.0
    %158 = vmatprep.subr.mxu0 0.0
    %159 = vmatpush1.msra.mxu0 0.0
    %160 = vmatprep.subr.mxu0 0.0
    %161 = vmatpush1.msra.mxu0 0.0
    %162 = vmatprep.subr.mxu0 0.0
    %163 = vmatpush1.msra.mxu0 0.0
    %164 = vmatprep.subr.mxu0 0.0
    %165 = vmatpush1.msra.mxu0 0.0
    %166 = vmatprep.subr.mxu0 0.0
    %167 = vmatpush1.msra.mxu0 0.0
    %168 = vmatprep.subr.mxu0 0.0
    %169 = vmatpush1.msra.mxu0 0.0
    %170 = vmatprep.subr.mxu0 0.0
    %171 = vmatpush1.msra.mxu0 0.0
    %172 = vmatprep.subr.mxu0 0.0
    %173 = vmatpush1.msra.mxu0 0.0
    %174 = vmatprep.subr.mxu0 0.0
    %175 = vmatpush1.msra.mxu0 0.0
    %176 = vmatprep.subr.mxu0 0.0
    %177 = vmatpush1.msra.mxu0 0.0
    %178 = vmatprep.subr.mxu0 0.0
    %179 = vmatpush1.msra.mxu0 0.0
    %180 = vmatprep.subr.mxu0 0.0
    %181 = vmatpush1.msra.mxu0 0.0
    %182 = vmatprep.subr.mxu0 0.0
    %183 = vmatpush1.msra.mxu0 0.0
    %184 = vmatprep.subr.mxu0 0.0
    %185 = vmatpush1.msra.mxu0 0.0
    %186 = vmatprep.subr.mxu0 0.0
    %187 = vmatpush1.msra.mxu0 0.0
    %188 = vmatprep.subr.mxu0 0.0
    %189 = vmatpush1.msra.mxu0 0.0
    %190 = vmatprep.subr.mxu0 0.0
    %191 = vmatpush1.msra.mxu0 0.0
    %192 = vmatprep.subr.mxu0 0.0
    %193 = vmatpush1.msra.mxu0 0.0
    %194 = vmatprep.subr.mxu0 0.0
    %195 = vmatpush1.msra.mxu0 0.0
    %196 = vmatprep.subr.mxu0 0.0
    %197 = vmatpush1.msra.mxu0 0.0
    %198 = vmatprep.subr.mxu0 0.0
    %199 = vmatpush1.msra.mxu0 0.0
    %200 = vmatprep.subr.mxu0 0.0
    %201 = vmatpush1.msra.mxu0 0.0
    %202 = vmatprep.subr.mxu0 0.0
    %203 = vmatpush1.msra.mxu0 0.0
    %204 = vmatprep.mubr.f32.mxu0 0.0
    %205 = vmatmul.mubr.f32.gmra.mrb[0].mxu0 %v138
    %v206 = vpop.f32.mrb[0].mxu0
    %v207 = vadd.f32 0.0, %v206
    %v208 = vpop.f32.mrb[0].mxu0
    %209 = vdwg.mxu0
    %v210 = vadd.f32 %v133, %v207
    %211 = vst.msk [vmem:[#allocation9] sm:$0xff] %vm62, %v210
    %s212 = scalar_lea.vmem [#allocation5], 8
    %v213 = vld [vmem:[%s212] sm:$0xff]
    %v215 = vsel %vm62, %v213, 0
    %217 = vmatprep.subr.mxu0 0.0
    %218 = vmatpush1.msra.mxu0 %v57
    %219 = vmatprep.subr.mxu0 0.0
    %220 = vmatpush1.msra.mxu0 %v58
    %221 = vmatprep.subr.mxu0 0.0
    %222 = vmatpush1.msra.mxu0 %v59
    %223 = vmatprep.subr.mxu0 0.0
    %224 = vmatpush1.msra.mxu0 %v60
    %225 = vmatprep.subr.mxu0 0.0
    %226 = vmatpush1.msra.mxu0 0.0
    %227 = vmatprep.subr.mxu0 0.0
    %228 = vmatpush1.msra.mxu0 0.0
    %229 = vmatprep.subr.mxu0 0.0
    %230 = vmatpush1.msra.mxu0 0.0
    %231 = vmatprep.subr.mxu0 0.0
    %232 = vmatpush1.msra.mxu0 0.0
    %233 = vmatprep.subr.mxu0 0.0
    %234 = vmatpush1.msra.mxu0 0.0
    %235 = vmatprep.subr.mxu0 0.0
    %236 = vmatpush1.msra.mxu0 0.0
    %237 = vmatprep.subr.mxu0 0.0
    %238 = vmatpush1.msra.mxu0 0.0
    %239 = vmatprep.subr.mxu0 0.0
    %240 = vmatpush1.msra.mxu0 0.0
    %241 = vmatprep.subr.mxu0 0.0
    %242 = vmatpush1.msra.mxu0 0.0
    %243 = vmatprep.subr.mxu0 0.0
    %244 = vmatpush1.msra.mxu0 0.0
    %245 = vmatprep.subr.mxu0 0.0
    %246 = vmatpush1.msra.mxu0 0.0
    %247 = vmatprep.subr.mxu0 0.0
    %248 = vmatpush1.msra.mxu0 0.0
    %249 = vmatprep.subr.mxu0 0.0
    %250 = vmatpush1.msra.mxu0 0.0
    %251 = vmatprep.subr.mxu0 0.0
    %252 = vmatpush1.msra.mxu0 0.0
    %253 = vmatprep.subr.mxu0 0.0
    %254 = vmatpush1.msra.mxu0 0.0
    %255 = vmatprep.subr.mxu0 0.0
    %256 = vmatpush1.msra.mxu0 0.0
    %257 = vmatprep.subr.mxu0 0.0
    %258 = vmatpush1.msra.mxu0 0.0
    %259 = vmatprep.subr.mxu0 0.0
    %260 = vmatpush1.msra.mxu0 0.0
    %261 = vmatprep.subr.mxu0 0.0
    %262 = vmatpush1.msra.mxu0 0.0
    %263 = vmatprep.subr.mxu0 0.0
    %264 = vmatpush1.msra.mxu0 0.0
    %265 = vmatprep.subr.mxu0 0.0
    %266 = vmatpush1.msra.mxu0 0.0
    %267 = vmatprep.subr.mxu0 0.0
    %268 = vmatpush1.msra.mxu0 0.0
    %269 = vmatprep.subr.mxu0 0.0
    %270 = vmatpush1.msra.mxu0 0.0
    %271 = vmatprep.subr.mxu0 0.0
    %272 = vmatpush1.msra.mxu0 0.0
    %273 = vmatprep.subr.mxu0 0.0
    %274 = vmatpush1.msra.mxu0 0.0
    %275 = vmatprep.subr.mxu0 0.0
    %276 = vmatpush1.msra.mxu0 0.0
    %277 = vmatprep.subr.mxu0 0.0
    %278 = vmatpush1.msra.mxu0 0.0
    %279 = vmatprep.subr.mxu0 0.0
    %280 = vmatpush1.msra.mxu0 0.0
    %281 = vmatprep.mubr.f32.mxu0 0.0
    %282 = vmatmul.mubr.f32.gmra.mrb[0].mxu0 %v215
    %v283 = vpop.f32.mrb[0].mxu0
    %v284 = vadd.f32 0.0, %v283
    %v285 = vpop.f32.mrb[0].mxu0
    %286 = vdwg.mxu0
    %v287 = vadd.f32 %v207, %v284
    %v288 = vadd.f32 %v133, %v284
    %s289 = scalar_lea.vmem [#allocation9], 8
    %290 = vst.msk [vmem:[%s289] sm:$0xff] %vm62, %v288
    %s291 = scalar_lea.vmem [#allocation5], 16
    %v292 = vld [vmem:[%s291] sm:$0xff]
    %v294 = vsel %vm62, %v292, 0
    %296 = vmatprep.subr.mxu0 0.0
    %297 = vmatpush1.msra.mxu0 %v57
    %298 = vmatprep.subr.mxu0 0.0
    %299 = vmatpush1.msra.mxu0 %v58
    %300 = vmatprep.subr.mxu0 0.0
    %301 = vmatpush1.msra.mxu0 %v59
    %302 = vmatprep.subr.mxu0 0.0
    %303 = vmatpush1.msra.mxu0 %v60
    %304 = vmatprep.subr.mxu0 0.0
    %305 = vmatpush1.msra.mxu0 0.0
    %306 = vmatprep.subr.mxu0 0.0
    %307 = vmatpush1.msra.mxu0 0.0
    %308 = vmatprep.subr.mxu0 0.0
    %309 = vmatpush1.msra.mxu0 0.0
    %310 = vmatprep.subr.mxu0 0.0
    %311 = vmatpush1.msra.mxu0 0.0
    %312 = vmatprep.subr.mxu0 0.0
    %313 = vmatpush1.msra.mxu0 0.0
    %314 = vmatprep.subr.mxu0 0.0
    %315 = vmatpush1.msra.mxu0 0.0
    %316 = vmatprep.subr.mxu0 0.0
    %317 = vmatpush1.msra.mxu0 0.0
    %318 = vmatprep.subr.mxu0 0.0
    %319 = vmatpush1.msra.mxu0 0.0
    %320 = vmatprep.subr.mxu0 0.0
    %321 = vmatpush1.msra.mxu0 0.0
    %322 = vmatprep.subr.mxu0 0.0
    %323 = vmatpush1.msra.mxu0 0.0
    %324 = vmatprep.subr.mxu0 0.0
    %325 = vmatpush1.msra.mxu0 0.0
    %326 = vmatprep.subr.mxu0 0.0
    %327 = vmatpush1.msra.mxu0 0.0
    %328 = vmatprep.subr.mxu0 0.0
    %329 = vmatpush1.msra.mxu0 0.0
    %330 = vmatprep.subr.mxu0 0.0
    %331 = vmatpush1.msra.mxu0 0.0
    %332 = vmatprep.subr.mxu0 0.0
    %333 = vmatpush1.msra.mxu0 0.0
    %334 = vmatprep.subr.mxu0 0.0
    %335 = vmatpush1.msra.mxu0 0.0
    %336 = vmatprep.subr.mxu0 0.0
    %337 = vmatpush1.msra.mxu0 0.0
    %338 = vmatprep.subr.mxu0 0.0
    %339 = vmatpush1.msra.mxu0 0.0
    %340 = vmatprep.subr.mxu0 0.0
    %341 = vmatpush1.msra.mxu0 0.0
    %342 = vmatprep.subr.mxu0 0.0
    %343 = vmatpush1.msra.mxu0 0.0
    %344 = vmatprep.subr.mxu0 0.0
    %345 = vmatpush1.msra.mxu0 0.0
    %346 = vmatprep.subr.mxu0 0.0
    %347 = vmatpush1.msra.mxu0 0.0
    %348 = vmatprep.subr.mxu0 0.0
    %349 = vmatpush1.msra.mxu0 0.0
    %350 = vmatprep.subr.mxu0 0.0
    %351 = vmatpush1.msra.mxu0 0.0
    %352 = vmatprep.subr.mxu0 0.0
    %353 = vmatpush1.msra.mxu0 0.0
    %354 = vmatprep.subr.mxu0 0.0
    %355 = vmatpush1.msra.mxu0 0.0
    %356 = vmatprep.subr.mxu0 0.0
    %357 = vmatpush1.msra.mxu0 0.0
    %358 = vmatprep.subr.mxu0 0.0
    %359 = vmatpush1.msra.mxu0 0.0
    %360 = vmatprep.mubr.f32.mxu0 0.0
    %361 = vmatmul.mubr.f32.gmra.mrb[0].mxu0 %v294
    %v362 = vpop.f32.mrb[0].mxu0
    %v363 = vadd.f32 0.0, %v362
    %v364 = vpop.f32.mrb[0].mxu0
    %365 = vdwg.mxu0
    %v366 = vadd.f32 %v287, %v363
    %v367 = vadd.f32 %v133, %v363
    %s368 = scalar_lea.vmem [#allocation9], 16
    %369 = vst.msk [vmem:[%s368] sm:$0xff] %vm62, %v367
    %s370 = scalar_lea.vmem [#allocation5], 24
    %v371 = vld [vmem:[%s370] sm:$0xff]
    %v373 = vsel %vm62, %v371, 0
    %375 = vmatprep.subr.mxu0 0.0
    %376 = vmatpush1.msra.mxu0 %v57
    %377 = vmatprep.subr.mxu0 0.0
    %378 = vmatpush1.msra.mxu0 %v58
    %379 = vmatprep.subr.mxu0 0.0
    %380 = vmatpush1.msra.mxu0 %v59
    %381 = vmatprep.subr.mxu0 0.0
    %382 = vmatpush1.msra.mxu0 %v60
    %383 = vmatprep.subr.mxu0 0.0
    %384 = vmatpush1.msra.mxu0 0.0
    %385 = vmatprep.subr.mxu0 0.0
    %386 = vmatpush1.msra.mxu0 0.0
    %387 = vmatprep.subr.mxu0 0.0
    %388 = vmatpush1.msra.mxu0 0.0
    %389 = vmatprep.subr.mxu0 0.0
    %390 = vmatpush1.msra.mxu0 0.0
    %391 = vmatprep.subr.mxu0 0.0
    %392 = vmatpush1.msra.mxu0 0.0
    %393 = vmatprep.subr.mxu0 0.0
    %394 = vmatpush1.msra.mxu0 0.0
    %395 = vmatprep.subr.mxu0 0.0
    %396 = vmatpush1.msra.mxu0 0.0
    %397 = vmatprep.subr.mxu0 0.0
    %398 = vmatpush1.msra.mxu0 0.0
    %399 = vmatprep.subr.mxu0 0.0
    %400 = vmatpush1.msra.mxu0 0.0
    %401 = vmatprep.subr.mxu0 0.0
    %402 = vmatpush1.msra.mxu0 0.0
    %403 = vmatprep.subr.mxu0 0.0
    %404 = vmatpush1.msra.mxu0 0.0
    %405 = vmatprep.subr.mxu0 0.0
    %406 = vmatpush1.msra.mxu0 0.0
    %407 = vmatprep.subr.mxu0 0.0
    %408 = vmatpush1.msra.mxu0 0.0
    %409 = vmatprep.subr.mxu0 0.0
    %410 = vmatpush1.msra.mxu0 0.0
    %411 = vmatprep.subr.mxu0 0.0
    %412 = vmatpush1.msra.mxu0 0.0
    %413 = vmatprep.subr.mxu0 0.0
    %414 = vmatpush1.msra.mxu0 0.0
    %415 = vmatprep.subr.mxu0 0.0
    %416 = vmatpush1.msra.mxu0 0.0
    %417 = vmatprep.subr.mxu0 0.0
    %418 = vmatpush1.msra.mxu0 0.0
    %419 = vmatprep.subr.mxu0 0.0
    %420 = vmatpush1.msra.mxu0 0.0
    %421 = vmatprep.subr.mxu0 0.0
    %422 = vmatpush1.msra.mxu0 0.0
    %423 = vmatprep.subr.mxu0 0.0
    %424 = vmatpush1.msra.mxu0 0.0
    %425 = vmatprep.subr.mxu0 0.0
    %426 = vmatpush1.msra.mxu0 0.0
    %427 = vmatprep.subr.mxu0 0.0
    %428 = vmatpush1.msra.mxu0 0.0
    %429 = vmatprep.subr.mxu0 0.0
    %430 = vmatpush1.msra.mxu0 0.0
    %431 = vmatprep.subr.mxu0 0.0
    %432 = vmatpush1.msra.mxu0 0.0
    %433 = vmatprep.subr.mxu0 0.0
    %434 = vmatpush1.msra.mxu0 0.0
    %435 = vmatprep.subr.mxu0 0.0
    %436 = vmatpush1.msra.mxu0 0.0
    %437 = vmatprep.subr.mxu0 0.0
    %438 = vmatpush1.msra.mxu0 0.0
    %439 = vmatprep.mubr.f32.mxu0 0.0
    %440 = vmatmul.mubr.f32.gmra.mrb[0].mxu0 %v373
    %v441 = vpop.f32.mrb[0].mxu0
    %v442 = vadd.f32 0.0, %v441
    %v443 = vpop.f32.mrb[0].mxu0
    %444 = vdwg.mxu0
    %v445 = vadd.f32 %v366, %v442
    %v446 = vadd.f32 %v133, %v442
    %s447 = scalar_lea.vmem [#allocation9], 24
    %448 = vst.msk [vmem:[%s447] sm:$0xff] %vm62, %v446
    %449 = vst.msk [vmem:[#allocation8] sm:$0xff] %vm62, %v445
    // Predicated region
    $region26: #{tpu_custom_call.1} parent=1 // pred_check
      _
    $region27: #{tpu_custom_call.1} parent=1 // pred_check_branch
      %451 = sbr.rel (0) target = $region29
    $region28: #{tpu_custom_call.1} parent=1 // pred_region
      %s453 = ssub.s32 128, 128
      %454 = vsyncadd [#allocation4], %s453
      %s456 = sshll.u32 [#allocation8], 4
      %s457 = int_to_ptr.vmem [resolvable:$true] %s456
      %459 = dma.vmem_to_hbm [thread:$0]  %s457, 128, %s3, [#allocation4]
    $region29: #{tpu_custom_call.1} parent=1 // pred_fallthru
      _
    // Predicated region
    $region30: #{tpu_custom_call.1} parent=1 // pred_check
      _
    $region31: #{tpu_custom_call.1} parent=1 // pred_check_branch
      %461 = sbr.rel (0) target = $region33
    $region32: #{tpu_custom_call.1} parent=1 // pred_region
      %s463 = ssub.s32 512, 512
      %464 = vsyncadd [#allocation10], %s463
      %s465 = sshll.u32 [#allocation9], 4
      %s466 = int_to_ptr.vmem [resolvable:$true] %s465
      %471 = dma.vmem_to_hbm [thread:$0]  %s466, 512, %s4, [#allocation10], 128, 128, 8
    $region33: #{tpu_custom_call.1} parent=1 // pred_fallthru
      _
    // Predicated region
    $region34: #{tpu_custom_call.1} parent=1 // pred_check
      _
    $region35: #{tpu_custom_call.1} parent=1 // pred_check_branch
      %473 = sbr.rel (0) target = $region37
    $region36: #{tpu_custom_call.1} parent=1 // pred_region
      %474 = dma.done [#allocation4], 128
    $region37: #{tpu_custom_call.1} parent=1 // pred_fallthru
      _
    // Predicated region
    $region38: #{tpu_custom_call.1} parent=1 // pred_check
      _
    $region39: #{tpu_custom_call.1} parent=1 // pred_check_branch
      %476 = sbr.rel (0) target = $region41
    $region40: #{tpu_custom_call.1} parent=1 // pred_region
      %477 = dma.done [#allocation10], 512
    $region41: #{tpu_custom_call.1} parent=1 // pred_fallthru
      _
    %478 = vsyncpa [#allocation3], 1
    %479 = vsyncpa [#allocation6], 1
    %480 = vsyncpa [#allocation4], 1
    %481 = vsyncpa [#allocation10], 1

</llo_original>
